<compile_context>
chip_gen: v6e
topology: v6e:2x2x1
jax: 0.10.0
libtpu: 0.0.40
codegen_flags: <defaults>
</compile_context>

<pallas_src>
import jax
import jax.numpy as jnp
import numpy as np
from jax.experimental import pallas as pl
from jax.experimental.pallas import tpu as pltpu

N_PAD = 128  # lane-dense padded class dimension (unmasked full-lane output store)


def nn2bow_kernel(x_ref, w1_ref, b1_ref, w2_ref, b2_ref, o_ref):
    # fc1: (bf16 x) @ (bf16 w1) on the MXU with f32 accumulation.
    h = jnp.dot(x_ref[...], w1_ref[...], preferred_element_type=jnp.float32)
    h = jnp.maximum(h + b1_ref[...], 0.0)  # bias + ReLU in f32

    # fc2 on the 128-lane padded class dim.  Padded w2 columns are zero and the
    # padded b2 entries are -1e30, so padded logits vanish in the softmax.
    logits = (
        jnp.dot(h, w2_ref[...], preferred_element_type=jnp.float32) + b2_ref[...]
    )

    # log_softmax over the class dim (max-shifted, all in f32).
    m = jnp.max(logits, axis=-1, keepdims=True)
    shifted = logits - m
    lse = jnp.log(jnp.sum(jnp.exp(shifted), axis=-1, keepdims=True))
    o_ref[...] = (shifted - lse).astype(o_ref.dtype)


def _vmem_budget():
    """(scoped vmem_limit_bytes, tm cap) chosen from the chip generation."""
    phys = 64 * 1024 * 1024  # conservative default (v7x per-TC physical VMEM)
    try:
        info = pltpu.get_tpu_info()
        phys = getattr(info, "vmem_capacity_bytes", phys) or phys
    except Exception:
        pass
    if phys >= 100 * 1024 * 1024:          # v5e / v6e: 128 MiB physical
        return 96 * 1024 * 1024, 1024
    return 48 * 1024 * 1024, 512           # v7x: 64 MiB physical


def nn2bow_forward(x, w1, b1, w2, b2, *, tm=None,
                   compute_dtype=jnp.bfloat16, out_dtype=jnp.float32):
    """x: (B, D); w1: (D, H); b1: (1, H) or (H,); w2: (H, C); b2: (1, C) or (C,)."""
    B, D = x.shape
    H = w1.shape[1]
    n_classes = w2.shape[1]
    assert n_classes <= N_PAD

    vmem_limit, tm_cap = _vmem_budget()

    x_itemsize = np.dtype(compute_dtype).itemsize
    out_itemsize = np.dtype(out_dtype).itemsize

    # Pad class dim to 128 lanes (lane-dense output store). Padded logits get a
    # huge negative bias so they vanish in the softmax denominator.
    w2p = jnp.zeros((H, N_PAD), jnp.float32).at[:, :n_classes].set(
        w2.astype(jnp.float32))
    b2p = jnp.full((1, N_PAD), -1e30, jnp.float32).at[:, :n_classes].set(
        b2.reshape(1, -1).astype(jnp.float32))
    b1r = b1.reshape(1, -1).astype(jnp.float32)

    # bf16 streaming inputs; the kernel accumulates in f32 on the MXU.
    xc = x.astype(compute_dtype)
    w1c = w1.astype(compute_dtype)

    # VMEM-resident bytes (weights with constant index_maps).
    resident = (D * H * x_itemsize      # w1
                + H * 4                 # b1
                + H * N_PAD * 4         # w2 (padded, f32)
                + N_PAD * 4)            # b2 (padded, f32)
    if resident > vmem_limit // 2:
        # TODO(synk): switch to the K-reduction accumulator path for huge D.
        raise NotImplementedError("w1 too large for the VMEM-resident path")

    # Row alignment: 8 sublanes for 32-bit, 16 for packed 16-bit output tiles.
    row_align = 8 if out_itemsize >= 4 else 16

    if tm is None:
        # Per-row streaming cost: double-buffered x tile + double-buffered
        # output tile; subtract resident weights from the budget first.
        per_row = 2 * D * x_itemsize + 2 * N_PAD * out_itemsize
        avail = (vmem_limit * 3) // 4 - resident  # headroom for bookkeeping
        cap = max(row_align, (avail // per_row) // row_align * row_align)
        tm = min(tm_cap, cap)
        if B >= 16:
            # >= 2 grid tiles so v7x's two TensorCores both get work.
            half = ((pl.cdiv(B, 2) + row_align - 1) // row_align) * row_align
            tm = min(tm, half)
        if B <= tm:
            tm = B  # full-extent block is always a legal block shape
    grid = (pl.cdiv(B, tm),)

    cost = pl.CostEstimate(
        flops=2 * B * D * H + 2 * B * H * N_PAD,
        transcendentals=B * (N_PAD + 1),
        bytes_accessed=(B * D * x_itemsize
                        + D * H * x_itemsize
                        + H * 4 + H * N_PAD * 4 + N_PAD * 4
                        + B * N_PAD * out_itemsize),
    )

    out_padded = pl.pallas_call(
        nn2bow_kernel,
        out_shape=jax.ShapeDtypeStruct((B, N_PAD), out_dtype),
        grid=grid,
        in_specs=[
            pl.BlockSpec((tm, D), lambda i: (i, 0)),        # x: streamed per tile
            pl.BlockSpec((D, H), lambda i: (0, 0)),         # w1: VMEM-resident
            pl.BlockSpec((1, H), lambda i: (0, 0)),         # b1: VMEM-resident
            pl.BlockSpec((H, N_PAD), lambda i: (0, 0)),     # w2 (padded, f32)
            pl.BlockSpec((1, N_PAD), lambda i: (0, 0)),     # b2 (padded, f32)
        ],
        out_specs=pl.BlockSpec((tm, N_PAD), lambda i: (i, 0)),
        compiler_params=pltpu.CompilerParams(
            dimension_semantics=("parallel",),
            vmem_limit_bytes=vmem_limit),
        cost_estimate=cost,
    )(xc, w1c, b1r, w2p, b2p)

    return out_padded[:, :n_classes].astype(jnp.float32)


def reference_forward(x, w1, b1, w2, b2):
    h = jnp.maximum(x @ w1 + b1.reshape(1, -1), 0.0)
    logits = h @ w2 + b2.reshape(1, -1)
    return jax.nn.log_softmax(logits, axis=1)


if __name__ == "__main__":
    # Shapes implied by the module: Linear(input_size, hidden), Linear(hidden, 2)
    batch, input_size, hidden_size, n_classes = 8, 64, 32, 2

    key = jax.random.PRNGKey(0)
    kx, k1, k2, k3, k4 = jax.random.split(key, 5)

    x = jax.random.normal(kx, (batch, input_size), dtype=jnp.float32)

    # Deterministic synthetic parameters (Kaiming-ish uniform, like nn.Linear init).
    lim1 = 1.0 / jnp.sqrt(input_size)
    lim2 = 1.0 / jnp.sqrt(hidden_size)
    w1 = jax.random.uniform(k1, (input_size, hidden_size), jnp.float32, -lim1, lim1)
    b1 = jax.random.uniform(k2, (1, hidden_size), jnp.float32, -lim1, lim1)
    w2 = jax.random.uniform(k3, (hidden_size, n_classes), jnp.float32, -lim2, lim2)
    b2 = jax.random.uniform(k4, (1, n_classes), jnp.float32, -lim2, lim2)

    ref = reference_forward(x, w1, b1, w2, b2)

    # 1) Exact-precision path (f32 streaming) vs f32 reference: tight tolerance.
    out_f32 = jax.block_until_ready(
        nn2bow_forward(x, w1, b1, w2, b2, compute_dtype=jnp.float32))
    assert out_f32.shape == (batch, n_classes)
    assert jnp.allclose(out_f32, ref, atol=1e-5, rtol=1e-5)

    # 2) Default bf16-streaming path (perf config): bf16 input rounding only.
    out_bf = jax.block_until_ready(nn2bow_forward(x, w1, b1, w2, b2))
    assert out_bf.shape == (batch, n_classes)
    assert jnp.allclose(out_bf, ref, atol=5e-2, rtol=5e-2)

    # 3) Multi-tile (grid > 1, pipelined, megacore-shardable) path with bf16
    #    output writeback.
    big_batch = 32
    xb = jax.random.normal(jax.random.PRNGKey(1), (big_batch, input_size),
                           dtype=jnp.float32)
    out_b = jax.block_until_ready(
        nn2bow_forward(xb, w1, b1, w2, b2, tm=16, out_dtype=jnp.bfloat16))
    ref_b = reference_forward(xb, w1, b1, w2, b2)
    assert out_b.shape == (big_batch, n_classes)
    assert jnp.allclose(out_b, ref_b, atol=5e-2, rtol=5e-2)

    print("KERNEL_OK")
</pallas_src>

<mosaic_0001>
module attributes {stable_mosaic.version = 11 : i64} {
  func.func @nn2bow_kernel(%arg0: i32, %arg1: memref<8x64xf32, #tpu.memory_space<vmem>>, %arg2: memref<64x32xf32, #tpu.memory_space<vmem>>, %arg3: memref<1x32xf32, #tpu.memory_space<vmem>>, %arg4: memref<32x128xf32, #tpu.memory_space<vmem>>, %arg5: memref<1x128xf32, #tpu.memory_space<vmem>>, %arg6: memref<8x128xf32, #tpu.memory_space<vmem>>) attributes {dimension_semantics = [#tpu.dimension_semantics<parallel>], iteration_bounds = array<i64: 1>, scalar_prefetch = 0 : i64, scratch_operands = 0 : i64, tpu.core_type = #tpu.core_type<tc>, window_params = [{transform_indices = @transform_0, window_bounds = array<i64: 8, 64>}, {pipeline_mode = #tpu.pipeline_mode<synchronous>, transform_indices = @transform_1, window_bounds = array<i64: 64, 32>}, {pipeline_mode = #tpu.pipeline_mode<synchronous>, transform_indices = @transform_2, window_bounds = array<i64: 1, 32>}, {pipeline_mode = #tpu.pipeline_mode<synchronous>, transform_indices = @transform_3, window_bounds = array<i64: 32, 128>}, {pipeline_mode = #tpu.pipeline_mode<synchronous>, transform_indices = @transform_4, window_bounds = array<i64: 1, 128>}, {transform_indices = @transform_5, window_bounds = array<i64: 8, 128>}]} {
    %c0 = arith.constant 0 : index
    %c0_0 = arith.constant 0 : index
    %0 = vector.load %arg1[%c0, %c0_0] : memref<8x64xf32, #tpu.memory_space<vmem>>, vector<8x64xf32>
    %c0_1 = arith.constant 0 : index
    %c0_2 = arith.constant 0 : index
    %1 = vector.load %arg2[%c0_1, %c0_2] : memref<64x32xf32, #tpu.memory_space<vmem>>, vector<64x32xf32>
    %cst = arith.constant dense<0.000000e+00> : vector<8x32xf32>
    %2 = tpu.matmul %0, %1, %cst {dimension_numbers = #tpu.dot_dimension_numbers<[1], [0], [0], [1], [0, 0, 1, 1], [], []>} : vector<8x64xf32>, vector<64x32xf32>, vector<8x32xf32> -> vector<8x32xf32>
    %c0_3 = arith.constant 0 : index
    %c0_4 = arith.constant 0 : index
    %3 = vector.load %arg3[%c0_3, %c0_4] : memref<1x32xf32, #tpu.memory_space<vmem>>, vector<1x32xf32>
    %4 = vector.broadcast %3 : vector<1x32xf32> to vector<8x32xf32>
    %5 = arith.addf %2, %4 : vector<8x32xf32>
    %cst_5 = arith.constant 0.000000e+00 : f32
    %6 = vector.broadcast %cst_5 : f32 to vector<8x32xf32>
    %7 = arith.maximumf %5, %6 : vector<8x32xf32>
    %c0_6 = arith.constant 0 : index
    %c0_7 = arith.constant 0 : index
    %8 = vector.load %arg4[%c0_6, %c0_7] : memref<32x128xf32, #tpu.memory_space<vmem>>, vector<32x128xf32>
    %cst_8 = arith.constant dense<0.000000e+00> : vector<8x128xf32>
    %9 = tpu.matmul %7, %8, %cst_8 {dimension_numbers = #tpu.dot_dimension_numbers<[1], [0], [0], [1], [0, 0, 1, 1], [], []>} : vector<8x32xf32>, vector<32x128xf32>, vector<8x128xf32> -> vector<8x128xf32>
    %c0_9 = arith.constant 0 : index
    %c0_10 = arith.constant 0 : index
    %10 = vector.load %arg5[%c0_9, %c0_10] : memref<1x128xf32, #tpu.memory_space<vmem>>, vector<1x128xf32>
    %11 = vector.broadcast %10 : vector<1x128xf32> to vector<8x128xf32>
    %12 = arith.addf %9, %11 : vector<8x128xf32>
    %cst_11 = arith.constant dense<0xFF800000> : vector<8xf32>
    %13 = vector.multi_reduction <maximumf>, %12, %cst_11 [1] : vector<8x128xf32> to vector<8xf32>
    %14 = vector.shape_cast %13 : vector<8xf32> to vector<8x1xf32>
    %15 = vector.broadcast %14 : vector<8x1xf32> to vector<8x128xf32>
    %16 = arith.subf %12, %15 : vector<8x128xf32>
    %17 = math.exp %16 : vector<8x128xf32>
    %cst_12 = arith.constant dense<0.000000e+00> : vector<8xf32>
    %18 = vector.multi_reduction <add>, %17, %cst_12 [1] : vector<8x128xf32> to vector<8xf32>
    %19 = vector.shape_cast %18 : vector<8xf32> to vector<8x1xf32>
    %20 = math.log %19 : vector<8x1xf32>
    %21 = vector.broadcast %20 : vector<8x1xf32> to vector<8x128xf32>
    %22 = arith.subf %16, %21 : vector<8x128xf32>
    %c0_13 = arith.constant 0 : index
    %c0_14 = arith.constant 0 : index
    %23 = vector.load %arg6[%c0_13, %c0_14] : memref<8x128xf32, #tpu.memory_space<vmem>>, vector<8x128xf32>
    tpu.vector_store %arg6[%c0_13, %c0_14], %22 {strides = array<i32>} : memref<8x128xf32, #tpu.memory_space<vmem>>, vector<8x128xf32>,
    return
  }
  func.func @transform_0(%arg0: i32) -> (i32, i32) {
    %c0_i32 = arith.constant 0 : i32
    %c0_i32_0 = arith.constant 0 : i32
    return %arg0, %c0_i32 : i32, i32
  }
  func.func @transform_1(%arg0: i32) -> (i32, i32) {
    %c0_i32 = arith.constant 0 : i32
    %c0_i32_0 = arith.constant 0 : i32
    %c0_i32_1 = arith.constant 0 : i32
    return %c0_i32, %c0_i32_0 : i32, i32
  }
  func.func @transform_2(%arg0: i32) -> (i32, i32) {
    %c0_i32 = arith.constant 0 : i32
    %c0_i32_0 = arith.constant 0 : i32
    %c0_i32_1 = arith.constant 0 : i32
    return %c0_i32, %c0_i32_0 : i32, i32
  }
  func.func @transform_3(%arg0: i32) -> (i32, i32) {
    %c0_i32 = arith.constant 0 : i32
    %c0_i32_0 = arith.constant 0 : i32
    %c0_i32_1 = arith.constant 0 : i32
    return %c0_i32, %c0_i32_0 : i32, i32
  }
  func.func @transform_4(%arg0: i32) -> (i32, i32) {
    %c0_i32 = arith.constant 0 : i32
    %c0_i32_0 = arith.constant 0 : i32
    %c0_i32_1 = arith.constant 0 : i32
    return %c0_i32, %c0_i32_0 : i32, i32
  }
  func.func @transform_5(%arg0: i32) -> (i32, i32) {
    %c0_i32 = arith.constant 0 : i32
    %c0_i32_0 = arith.constant 0 : i32
    return %arg0, %c0_i32 : i32, i32
  }
}

</mosaic_0001>

<llo_original>
// kernel: tpu_custom_call.1
$region0: #{tpu_custom_call.1}
  #allocation0 [shape = 'u32[]', space=smem, size = 0x4, offset = 0x4, fixed_abs, tag = 'smem constant byte address 0x4 - core index']
  #allocation1 [shape = 'u32[144,128]{1,0:T(1,128)}', space=vmem, size = 0x12000, scoped, tag = 'internal scratch']
  %s0 = inlined_call_operand.vmem [shape: f32[8,64], index: 0, kind: input, shape index: {}]
  %s1 = inlined_call_operand.vmem [shape: f32[64,32], index: 1, kind: input, shape index: {}]
  %s2 = inlined_call_operand.vmem [shape: f32[1,32], index: 2, kind: input, shape index: {}]
  %s3 = inlined_call_operand.vmem [shape: f32[32,128], index: 3, kind: input, shape index: {}]
  %s4 = inlined_call_operand.vmem [shape: f32[1,128], index: 4, kind: input, shape index: {}]
  %s5 = inlined_call_operand.hbm [shape: f32[8,128], index: 5, kind: output, shape index: {}]
  %s6 = sld [smem:[#allocation0]]
  $region30: #{tpu_custom_call.1} parent=0
    _
  %s8 = ssub.s32 1, %s6
  %s9 = scalar_select 0, %s8, %s6
  $region1: #{tpu_custom_call.1} parent=0
    #allocation2 [shape = 'u8[4096]{0}', space=vmem, size = 0x1000, scoped, tag = 'output window, operand 0, single buffered']
    #allocation3 [shape = 's32[1]{0}', space=sflag, size = 0x4, scoped, tag = 'scoped memory for tpu_custom_call.1']
    %10 = vsyncpa [#allocation3], 0
    // Predicated region
    $region2: #{tpu_custom_call.1} parent=1 // pred_check
      _
    $region3: #{tpu_custom_call.1} parent=1 // pred_check_branch
      %12 = sbr.rel (0) target = $region5
    $region4: #{tpu_custom_call.1} parent=1 // pred_region
      _
    $region5: #{tpu_custom_call.1} parent=1 // pred_fallthru
      _
    // Predicated region
    $region6: #{tpu_custom_call.1} parent=1 // pred_check
      _
    $region7: #{tpu_custom_call.1} parent=1 // pred_check_branch
      %14 = sbr.rel (0) target = $region9
    $region8: #{tpu_custom_call.1} parent=1 // pred_region
      _
    $region9: #{tpu_custom_call.1} parent=1 // pred_fallthru
      _
    // Predicated region
    $region10: #{tpu_custom_call.1} parent=1 // pred_check
      _
    $region11: #{tpu_custom_call.1} parent=1 // pred_check_branch
      %16 = sbr.rel (0) target = $region13
    $region12: #{tpu_custom_call.1} parent=1 // pred_region
      _
    $region13: #{tpu_custom_call.1} parent=1 // pred_fallthru
      _
    // Predicated region
    $region14: #{tpu_custom_call.1} parent=1 // pred_check
      _
    $region15: #{tpu_custom_call.1} parent=1 // pred_check_branch
      %18 = sbr.rel (0) target = $region17
    $region16: #{tpu_custom_call.1} parent=1 // pred_region
      _
    $region17: #{tpu_custom_call.1} parent=1 // pred_fallthru
      _
    // Predicated region
    $region18: #{tpu_custom_call.1} parent=1 // pred_check
      _
    $region19: #{tpu_custom_call.1} parent=1 // pred_check_branch
      %20 = sbr.rel (0) target = $region21
    $region20: #{tpu_custom_call.1} parent=1 // pred_region
      _
    $region21: #{tpu_custom_call.1} parent=1 // pred_fallthru
      _
    %v21 = vld [vmem:[%s0] sm:$0xff]
    %v22 = vld [vmem:[%s1] sm:$0xff]
    %v23 = vld [vmem:[%s1 + $0x8] sm:$0xff]
    %v24 = vld [vmem:[%s1 + $0x10] sm:$0xff]
    %v25 = vld [vmem:[%s1 + $0x18] sm:$0xff]
    %v26 = vld [vmem:[%s1 + $0x20] sm:$0xff]
    %v27 = vld [vmem:[%s1 + $0x28] sm:$0xff]
    %v28 = vld [vmem:[%s1 + $0x30] sm:$0xff]
    %v29 = vld [vmem:[%s1 + $0x38] sm:$0xff]
    %v30 = vld [vmem:[%s2] sm:$0x1]
    %v32 = vlaneseq
    %v33 = vshrl.u32 %v32, 7
    %v34 = vsub.s32 0, %v33
    %v35 = vrot.slane %v30, %v34
    %vm37 = vcmask 523264
    %v39 = vsel %vm37, %v21, 0
    %41 = vmatprep.subr.mxu0 0.0
    %42 = vmatpush1.msra.mxu0 0.0
    %43 = vmatprep.subr.mxu0 0.0
    %44 = vmatpush1.msra.mxu0 0.0
    %45 = vmatprep.subr.mxu0 0.0
    %46 = vmatpush1.msra.mxu0 0.0
    %47 = vmatprep.subr.mxu0 0.0
    %48 = vmatpush1.msra.mxu0 0.0
    %49 = vmatprep.subr.mxu0 0.0
    %50 = vmatpush1.msra.mxu0 0.0
    %51 = vmatprep.subr.mxu0 0.0
    %52 = vmatpush1.msra.mxu0 0.0
    %53 = vmatprep.subr.mxu0 0.0
    %54 = vmatpush1.msra.mxu0 0.0
    %55 = vmatprep.subr.mxu0 0.0
    %56 = vmatpush1.msra.mxu0 0.0
    %57 = vmatprep.subr.mxu0 0.0
    %58 = vmatpush1.msra.mxu0 %v29
    %59 = vmatprep.subr.mxu0 0.0
    %60 = vmatpush1.msra.mxu0 %v28
    %61 = vmatprep.subr.mxu0 0.0
    %62 = vmatpush1.msra.mxu0 %v27
    %63 = vmatprep.subr.mxu0 0.0
    %64 = vmatpush1.msra.mxu0 %v26
    %65 = vmatprep.subr.mxu0 0.0
    %66 = vmatpush1.msra.mxu0 %v25
    %67 = vmatprep.subr.mxu0 0.0
    %68 = vmatpush1.msra.mxu0 %v24
    %69 = vmatprep.subr.mxu0 0.0
    %70 = vmatpush1.msra.mxu0 %v23
    %71 = vmatprep.subr.mxu0 0.0
    %72 = vmatpush1.msra.mxu0 %v22
    %73 = vmatprep.subr.mxu0 0.0
    %74 = vmatpush2.msra.mxu0 0.0
    %75 = vmatprep.subr.mxu0 0.0
    %76 = vmatpush2.msra.mxu0 0.0
    %77 = vmatprep.subr.mxu0 0.0
    %78 = vmatpush2.msra.mxu0 0.0
    %79 = vmatprep.subr.mxu0 0.0
    %80 = vmatpush2.msra.mxu0 0.0
    %81 = vmatprep.subr.mxu0 0.0
    %82 = vmatpush2.msra.mxu0 0.0
    %83 = vmatprep.subr.mxu0 0.0
    %84 = vmatpush2.msra.mxu0 0.0
    %85 = vmatprep.subr.mxu0 0.0
    %86 = vmatpush2.msra.mxu0 0.0
    %87 = vmatprep.subr.mxu0 0.0
    %88 = vmatpush2.msra.mxu0 0.0
    %89 = vmatprep.subr.mxu0 0.0
    %90 = vmatpush2.msra.mxu0 0.0
    %91 = vmatprep.subr.mxu0 0.0
    %92 = vmatpush2.msra.mxu0 0.0
    %93 = vmatprep.subr.mxu0 0.0
    %94 = vmatpush2.msra.mxu0 0.0
    %95 = vmatprep.subr.mxu0 0.0
    %96 = vmatpush2.msra.mxu0 0.0
    %97 = vmatprep.subr.mxu0 0.0
    %98 = vmatpush2.msra.mxu0 0.0
    %99 = vmatprep.subr.mxu0 0.0
    %100 = vmatpush2.msra.mxu0 0.0
    %101 = vmatprep.subr.mxu0 0.0
    %102 = vmatpush2.msra.mxu0 0.0
    %103 = vmatprep.subr.mxu0 0.0
    %104 = vmatpush2.msra.mxu0 0.0
    %105 = vmatprep.mubr.f32.mxu0 0.0
    %106 = vmatmul.mubr.f32.gmra.mxu0 %v39
    %v107 = vpop.f32.mrf.mxu0
    %v108 = vadd.f32 %v35, %v107
    %v109 = vpop.f32.mrf.mxu0
    %110 = vdwg.mxu0
    %v111 = vmax.f32 %v108, 0.0
    %v112 = vld [vmem:[%s3] sm:$0xff]
    %v113 = vld [vmem:[%s3 + $0x8] sm:$0xff]
    %v114 = vld [vmem:[%s3 + $0x10] sm:$0xff]
    %v115 = vld [vmem:[%s3 + $0x18] sm:$0xff]
    %v116 = vld [vmem:[%s4] sm:$0x1]
    %v118 = vlaneseq
    %v119 = vshrl.u32 %v118, 7
    %v120 = vsub.s32 0, %v119
    %v121 = vrot.slane %v116, %v120
    %vm123 = vcmask 261120
    %v125 = vsel %vm123, %v111, 0
    %127 = vmatprep.subr.mxu0 0.0
    %128 = vmatpush1.msra.mxu0 0.0
    %129 = vmatprep.subr.mxu0 0.0
    %130 = vmatpush1.msra.mxu0 0.0
    %131 = vmatprep.subr.mxu0 0.0
    %132 = vmatpush1.msra.mxu0 0.0
    %133 = vmatprep.subr.mxu0 0.0
    %134 = vmatpush1.msra.mxu0 0.0
    %135 = vmatprep.subr.mxu0 0.0
    %136 = vmatpush1.msra.mxu0 0.0
    %137 = vmatprep.subr.mxu0 0.0
    %138 = vmatpush1.msra.mxu0 0.0
    %139 = vmatprep.subr.mxu0 0.0
    %140 = vmatpush1.msra.mxu0 0.0
    %141 = vmatprep.subr.mxu0 0.0
    %142 = vmatpush1.msra.mxu0 0.0
    %143 = vmatprep.subr.mxu0 0.0
    %144 = vmatpush1.msra.mxu0 0.0
    %145 = vmatprep.subr.mxu0 0.0
    %146 = vmatpush1.msra.mxu0 0.0
    %147 = vmatprep.subr.mxu0 0.0
    %148 = vmatpush1.msra.mxu0 0.0
    %149 = vmatprep.subr.mxu0 0.0
    %150 = vmatpush1.msra.mxu0 0.0
    %151 = vmatprep.subr.mxu0 0.0
    %152 = vmatpush1.msra.mxu0 %v115
    %153 = vmatprep.subr.mxu0 0.0
    %154 = vmatpush1.msra.mxu0 %v114
    %155 = vmatprep.subr.mxu0 0.0
    %156 = vmatpush1.msra.mxu0 %v113
    %157 = vmatprep.subr.mxu0 0.0
    %158 = vmatpush1.msra.mxu0 %v112
    %159 = vmatprep.subr.mxu0 0.0
    %160 = vmatpush2.msra.mxu0 0.0
    %161 = vmatprep.subr.mxu0 0.0
    %162 = vmatpush2.msra.mxu0 0.0
    %163 = vmatprep.subr.mxu0 0.0
    %164 = vmatpush2.msra.mxu0 0.0
    %165 = vmatprep.subr.mxu0 0.0
    %166 = vmatpush2.msra.mxu0 0.0
    %167 = vmatprep.subr.mxu0 0.0
    %168 = vmatpush2.msra.mxu0 0.0
    %169 = vmatprep.subr.mxu0 0.0
    %170 = vmatpush2.msra.mxu0 0.0
    %171 = vmatprep.subr.mxu0 0.0
    %172 = vmatpush2.msra.mxu0 0.0
    %173 = vmatprep.subr.mxu0 0.0
    %174 = vmatpush2.msra.mxu0 0.0
    %175 = vmatprep.subr.mxu0 0.0
    %176 = vmatpush2.msra.mxu0 0.0
    %177 = vmatprep.subr.mxu0 0.0
    %178 = vmatpush2.msra.mxu0 0.0
    %179 = vmatprep.subr.mxu0 0.0
    %180 = vmatpush2.msra.mxu0 0.0
    %181 = vmatprep.subr.mxu0 0.0
    %182 = vmatpush2.msra.mxu0 0.0
    %183 = vmatprep.subr.mxu0 0.0
    %184 = vmatpush2.msra.mxu0 0.0
    %185 = vmatprep.subr.mxu0 0.0
    %186 = vmatpush2.msra.mxu0 0.0
    %187 = vmatprep.subr.mxu0 0.0
    %188 = vmatpush2.msra.mxu0 0.0
    %189 = vmatprep.subr.mxu0 0.0
    %190 = vmatpush2.msra.mxu0 0.0
    %191 = vmatprep.mubr.f32.mxu0 0.0
    %192 = vmatmul.mubr.f32.gmra.mxu0 %v125
    %v193 = vpop.f32.mrf.mxu0
    %v194 = vadd.f32 %v121, %v193
    %v195 = vpop.f32.mrf.mxu0
    %196 = vdwg.mxu0
    %197 = vmax.xlane.f32.xlu0 %v194
    %v198 = vpop.xlane.xlu0 %197
    %v199 = vsub.f32 %v194, %v198
    %v200 = vmul.f32 %v199, 1.442695
    %v201 = vpow.pop %v200
    %202 = vadd.xlane.f32.xlu0 %v201
    %v203 = vpop.xlane.xlu0 %202
    %v204 = vlog2.pop %v203
    %v205 = vmul.f32 %v204, 0.6931472
    %v206 = vsub.f32 %v199, %v205
    %207 = vst [vmem:[#allocation2] sm:$0xff] %v206
    // Predicated region
    $region22: #{tpu_custom_call.1} parent=1 // pred_check
      _
    $region23: #{tpu_custom_call.1} parent=1 // pred_check_branch
      %209 = sbr.rel (0) target = $region25
    $region24: #{tpu_custom_call.1} parent=1 // pred_region
      %s211 = ssub.s32 128, 128
      %212 = vsyncadd [#allocation3], %s211
      %s214 = sshll.u32 [#allocation2], 4
      %s215 = int_to_ptr.vmem [resolvable:$true] %s214
      %217 = dma.vmem_to_hbm [thread:$0]  %s215, 128, %s5, [#allocation3]
    $region25: #{tpu_custom_call.1} parent=1 // pred_fallthru
      _
    // Predicated region
    $region26: #{tpu_custom_call.1} parent=1 // pred_check
      _
    $region27: #{tpu_custom_call.1} parent=1 // pred_check_branch
      %219 = sbr.rel (0) target = $region29
    $region28: #{tpu_custom_call.1} parent=1 // pred_region
      %220 = dma.done [#allocation3], 128
    $region29: #{tpu_custom_call.1} parent=1 // pred_fallthru
      _
    %221 = vsyncpa [#allocation3], 1

</llo_original>
